<compile_context>
chip_gen: v6e
topology: v6e:2x2x1
jax: 0.10.0
libtpu: 0.0.40
codegen_flags: <defaults>
</compile_context>

<pallas_src>
import jax
import jax.numpy as jnp
from jax.experimental import pallas as pl
from jax.experimental.pallas import tpu as pltpu


def _cdiv(a: int, b: int) -> int:
    return -(-a // b)


def _round_up(v: int, m: int) -> int:
    return _cdiv(v, m) * m


def _even_split(dim: int, align: int, cap: int) -> int:
    """Smallest `align`-multiple tile covering `dim` in the fewest tiles, <= max(cap, align)."""
    aligned = _round_up(dim, align)
    if aligned <= cap:
        return aligned
    nt = _cdiv(aligned, cap)
    return _round_up(_cdiv(aligned, nt), align)


def _largest_divisor_leq(n: int, cap: int) -> int:
    cap = max(1, min(n, cap))
    for d in range(cap, 0, -1):
        if n % d == 0:
            return d
    return 1


def bmm_kernel(x_ref, y_ref, o_ref):
    # x_ref: (B_BLK, tm, tk), y_ref: (B_BLK, tk, tn), o_ref: (B_BLK, tm, tn).
    # The output block index is constant over the innermost k axis, so o_ref
    # stays resident in VMEM across k and serves directly as the f32 accumulator.
    @pl.when(pl.program_id(3) == 0)
    def _():
        o_ref[...] = jnp.zeros_like(o_ref)

    # Batched contraction on the MXU (jnp.dot is not batched -> einsum).
    o_ref[...] += jnp.einsum(
        "bmk,bkn->bmn", x_ref[...], y_ref[...],
        preferred_element_type=jnp.float32)


def batched_matmul(x: jax.Array, y: jax.Array, *,
                   tm_max: int = 512, tn_max: int = 512, tk_max: int = 1024,
                   b_max: int = 16) -> jax.Array:
    assert x.dtype == jnp.float32 and y.dtype == jnp.float32
    n2, n0, mid = x.shape
    n2y, midy, n1 = y.shape
    assert n2 == n2y and mid == midy

    # M / N tiles: (8,128)-aligned even splits. Edge blocks may overhang the
    # array; Pallas drops the out-of-bounds rows/cols on writeback, and the
    # garbage read in the x/y edge blocks only feeds those dropped rows/cols,
    # so no host-side padding is needed for M or N.
    tm = _even_split(n0, 8, tm_max)
    tn = _even_split(n1, 128, tn_max)

    # K tile: garbage along K would corrupt the accumulation, so K is either a
    # single full-dim tile (no padding, no split) or zero-padded to an even split.
    if mid <= tk_max:
        tk, kp = mid, mid
    else:
        tk = _even_split(mid, 128, tk_max)
        kp = _round_up(mid, tk)
    if kp != mid:
        x = jnp.pad(x, ((0, 0), (0, 0), (0, kp - mid)))
        y = jnp.pad(y, ((0, 0), (0, kp - mid), (0, 0)))

    grid_m = _cdiv(n0, tm)
    grid_n = _cdiv(n1, tn)
    grid_k = kp // tk

    # Group several batch elements per grid step only when the per-batch
    # problem is a single tile (amortizes the ~0.35us/step overhead); b_blk is
    # a divisor of N2 so no phantom batch work is ever computed.
    if n2 > 1 and grid_m == 1 and grid_n == 1 and grid_k == 1:
        per_batch_bytes = 4 * (tm * tk + tk * tn + tm * tn)
        group_budget = 8 * 1024 * 1024  # per-buffer; double-buffering ~2x this
        b_blk = _largest_divisor_leq(
            n2, min(b_max, max(1, group_budget // per_batch_bytes)))
    else:
        b_blk = 1
    grid_b = n2 // b_blk

    grid = (grid_b, grid_m, grid_n, grid_k)

    # TODO(synk): bf16 inputs (f32 accumulation) would ~4x MXU throughput on
    # v6e/v7x and halve input HBM bytes, but the reference asserts strict f32
    # input semantics, so keep f32 operands.
    # TODO(synk): on v7x, sweep pltpu.CORE_PARALLEL on the largest parallel
    # grid axis and pipeline_mode=pl.Buffered(3) on the x/y in_specs.
    return pl.pallas_call(
        bmm_kernel,
        out_shape=jax.ShapeDtypeStruct((n2, n0, n1), jnp.float32),
        grid=grid,
        in_specs=[
            pl.BlockSpec((b_blk, tm, tk), lambda b, i, j, k: (b, i, k)),
            pl.BlockSpec((b_blk, tk, tn), lambda b, i, j, k: (b, k, j)),
        ],
        out_specs=pl.BlockSpec((b_blk, tm, tn), lambda b, i, j, k: (b, i, j)),
        compiler_params=pltpu.CompilerParams(
            dimension_semantics=("parallel", "parallel", "parallel", "arbitrary"),
            vmem_limit_bytes=48 * 1024 * 1024),
    )(x, y)


if __name__ == "__main__":
    key = jax.random.PRNGKey(0)
    k0, k1, k2, k3, k4, k5 = jax.random.split(key, 6)
    bmm = jax.jit(batched_matmul)

    # Small shape consistent with the Triton solve(): x (N2, N0, MID), y (N2, MID, N1).
    N2, N0, MID, N1 = 2, 16, 32, 24
    x = jax.random.normal(k0, (N2, N0, MID), dtype=jnp.float32)
    y = jax.random.normal(k1, (N2, MID, N1), dtype=jnp.float32)
    z = bmm(x, y)
    jax.block_until_ready(z)
    ref = jnp.einsum("bmk,bkn->bmn", x, y)
    assert z.shape == (N2, N0, N1)
    assert jnp.allclose(z, ref, atol=1e-4, rtol=1e-4)

    # Awkward non-multiple shape from the review: single full-dim K tile,
    # partial M/N edge blocks, batch grouping with b_blk=3 (divisor of N2).
    N2, N0, MID, N1 = 3, 300, 520, 260
    x2 = jax.random.normal(k2, (N2, N0, MID), dtype=jnp.float32)
    y2 = jax.random.normal(k3, (N2, MID, N1), dtype=jnp.float32)
    z2 = bmm(x2, y2)
    jax.block_until_ready(z2)
    ref2 = jnp.einsum("bmk,bkn->bmn", x2, y2)
    assert z2.shape == (N2, N0, N1)
    assert jnp.allclose(z2, ref2, atol=1e-2, rtol=1e-3)

    # Exercises the split-K path (minimal zero-padded K, multi-step
    # accumulation into o_ref) with partial M/N blocks and b_blk=1.
    N2, N0, MID, N1 = 2, 136, 1100, 200
    x3 = jax.random.normal(k4, (N2, N0, MID), dtype=jnp.float32)
    y3 = jax.random.normal(k5, (N2, MID, N1), dtype=jnp.float32)
    z3 = bmm(x3, y3)
    jax.block_until_ready(z3)
    ref3 = jnp.einsum("bmk,bkn->bmn", x3, y3)
    assert z3.shape == (N2, N0, N1)
    assert jnp.allclose(z3, ref3, atol=1e-2, rtol=1e-3)

    print("KERNEL_OK")
</pallas_src>

<mosaic_0001>
module attributes {stable_mosaic.version = 11 : i64} {
  func.func @bmm_kernel(%arg0: i32, %arg1: i32, %arg2: i32, %arg3: i32, %arg4: memref<2x16x32xf32, #tpu.memory_space<vmem>>, %arg5: memref<2x32x128xf32, #tpu.memory_space<vmem>>, %arg6: memref<2x16x128xf32, #tpu.memory_space<vmem>>) attributes {dimension_semantics = [#tpu.dimension_semantics<parallel>, #tpu.dimension_semantics<parallel>, #tpu.dimension_semantics<parallel>, #tpu.dimension_semantics<arbitrary>], iteration_bounds = array<i64: 1, 1, 1, 1>, scalar_prefetch = 0 : i64, scratch_operands = 0 : i64, tpu.core_type = #tpu.core_type<tc>, window_params = [{transform_indices = @transform_0, window_bounds = array<i64: 2, 16, 32>}, {transform_indices = @transform_1, window_bounds = array<i64: 2, 32, 128>}, {transform_indices = @transform_2, window_bounds = array<i64: 2, 16, 128>}]} {
    %c0_i32 = arith.constant 0 : i32
    %0 = arith.cmpi eq, %arg3, %c0_i32 : i32
    %1 = arith.extui %0 : i1 to i32
    %c0_i32_0 = arith.constant 0 : i32
    %2 = arith.cmpi ne, %1, %c0_i32_0 : i32
    scf.if %2 {
      %cst_12 = arith.constant 0.000000e+00 : f32
      %9 = vector.broadcast %cst_12 : f32 to vector<2x16x128xf32>
      %c0_13 = arith.constant 0 : index
      %c0_14 = arith.constant 0 : index
      %c0_15 = arith.constant 0 : index
      %10 = vector.load %arg6[%c0_13, %c0_14, %c0_15] : memref<2x16x128xf32, #tpu.memory_space<vmem>>, vector<2x16x128xf32>
      tpu.vector_store %arg6[%c0_13, %c0_14, %c0_15], %9 {strides = array<i32>} : memref<2x16x128xf32, #tpu.memory_space<vmem>>, vector<2x16x128xf32>,
    } else {
    }
    %c0 = arith.constant 0 : index
    %c0_1 = arith.constant 0 : index
    %c0_2 = arith.constant 0 : index
    %3 = vector.load %arg6[%c0, %c0_1, %c0_2] : memref<2x16x128xf32, #tpu.memory_space<vmem>>, vector<2x16x128xf32>
    %c0_3 = arith.constant 0 : index
    %c0_4 = arith.constant 0 : index
    %c0_5 = arith.constant 0 : index
    %4 = vector.load %arg4[%c0_3, %c0_4, %c0_5] : memref<2x16x32xf32, #tpu.memory_space<vmem>>, vector<2x16x32xf32>
    %c0_6 = arith.constant 0 : index
    %c0_7 = arith.constant 0 : index
    %c0_8 = arith.constant 0 : index
    %5 = vector.load %arg5[%c0_6, %c0_7, %c0_8] : memref<2x32x128xf32, #tpu.memory_space<vmem>>, vector<2x32x128xf32>
    "tpu.trace_start"() <{level = 10 : i32, message = "bmk,bkn->bmn"}> : () -> ()
    %cst = arith.constant dense<0.000000e+00> : vector<2x16x128xf32>
    %6 = tpu.matmul %4, %5, %cst {dimension_numbers = #tpu.dot_dimension_numbers<[2], [1], [1], [2], [0, 0, 0, 1, 1, 2], [0], [0]>} : vector<2x16x32xf32>, vector<2x32x128xf32>, vector<2x16x128xf32> -> vector<2x16x128xf32>
    "tpu.trace_stop"() : () -> ()
    %7 = arith.addf %3, %6 : vector<2x16x128xf32>
    %c0_9 = arith.constant 0 : index
    %c0_10 = arith.constant 0 : index
    %c0_11 = arith.constant 0 : index
    %8 = vector.load %arg6[%c0_9, %c0_10, %c0_11] : memref<2x16x128xf32, #tpu.memory_space<vmem>>, vector<2x16x128xf32>
    tpu.vector_store %arg6[%c0_9, %c0_10, %c0_11], %7 {strides = array<i32>} : memref<2x16x128xf32, #tpu.memory_space<vmem>>, vector<2x16x128xf32>,
    return
  }
  func.func @transform_0(%arg0: i32, %arg1: i32, %arg2: i32, %arg3: i32) -> (i32, i32, i32) {
    %c0_i32 = arith.constant 0 : i32
    return %arg0, %arg1, %arg3 : i32, i32, i32
  }
  func.func @transform_1(%arg0: i32, %arg1: i32, %arg2: i32, %arg3: i32) -> (i32, i32, i32) {
    %c0_i32 = arith.constant 0 : i32
    return %arg0, %arg3, %arg2 : i32, i32, i32
  }
  func.func @transform_2(%arg0: i32, %arg1: i32, %arg2: i32, %arg3: i32) -> (i32, i32, i32) {
    %c0_i32 = arith.constant 0 : i32
    return %arg0, %arg1, %arg2 : i32, i32, i32
  }
}

</mosaic_0001>

<llo_original>
// kernel: batched_matmul.1
$region0: #{batched_matmul.1}
  #allocation0 [shape = 'u32[]', space=smem, size = 0x4, offset = 0x4, fixed_abs, tag = 'smem constant byte address 0x4 - core index']
  #allocation1 [shape = 'u32[144,128]{1,0:T(1,128)}', space=vmem, size = 0x12000, scoped, tag = 'internal scratch']
  %s0 = inlined_call_operand.vmem [shape: f32[2,16,32], index: 0, kind: input, shape index: {}]
  %s1 = inlined_call_operand.vmem [shape: f32[2,32,24], index: 1, kind: input, shape index: {}]
  %s2 = inlined_call_operand.hbm [shape: f32[2,16,24], index: 2, kind: output, shape index: {}]
  %s3 = sld [smem:[#allocation0]]
  $region22: #{batched_matmul.1} parent=0
    _
  %s5 = ssub.s32 1, %s3
  %s6 = scalar_select 0, %s5, %s3
  $region1: #{batched_matmul.1} parent=0
    #allocation2 [shape = 'u8[16384]{0}', space=vmem, size = 0x4000, scoped, tag = 'output window, operand 0, single buffered']
    #allocation3 [shape = 's32[1]{0}', space=sflag, size = 0x4, scoped, tag = 'scoped memory for batched_matmul.1']
    %7 = vsyncpa [#allocation3], 0
    // Predicated region
    $region2: #{batched_matmul.1} parent=1 // pred_check
      _
    $region3: #{batched_matmul.1} parent=1 // pred_check_branch
      %9 = sbr.rel (0) target = $region5
    $region4: #{batched_matmul.1} parent=1 // pred_region
      _
    $region5: #{batched_matmul.1} parent=1 // pred_fallthru
      _
    // Predicated region
    $region6: #{batched_matmul.1} parent=1 // pred_check
      _
    $region7: #{batched_matmul.1} parent=1 // pred_check_branch
      %11 = sbr.rel (0) target = $region9
    $region8: #{batched_matmul.1} parent=1 // pred_region
      _
    $region9: #{batched_matmul.1} parent=1 // pred_fallthru
      _
    %p12 = scmp.eq.s32.totalorder 0, 0
    // Predicated region
    $region10: #{batched_matmul.1} parent=1 // pred_check
      %p13 = pneg %p12
    $region11: #{batched_matmul.1} parent=1 // pred_check_branch
      %15 = sbr.rel (%p13) target = $region13
    $region12: #{batched_matmul.1} parent=1 // pred_region
      %16 = vst [vmem:[#allocation2] sm:$0xff] 0.0
      %17 = vst [vmem:[#allocation2 + $0x8] sm:$0xff] 0.0
      %18 = vst [vmem:[#allocation2 + $0x10] sm:$0xff] 0.0
      %19 = vst [vmem:[#allocation2 + $0x18] sm:$0xff] 0.0
    $region13: #{batched_matmul.1} parent=1 // pred_fallthru
      _
    %v20 = vld [vmem:[#allocation2] sm:$0xff]
    %v21 = vld [vmem:[#allocation2 + $0x8] sm:$0xff]
    %v22 = vld [vmem:[#allocation2 + $0x10] sm:$0xff]
    %v23 = vld [vmem:[#allocation2 + $0x18] sm:$0xff]
    %v24 = vld [vmem:[%s0] sm:$0xff]
    %v25 = vld [vmem:[%s0 + $0x8] sm:$0xff]
    %v26 = vld [vmem:[%s0 + $0x10] sm:$0xff]
    %v27 = vld [vmem:[%s0 + $0x18] sm:$0xff]
    %v28 = vld [vmem:[%s1] sm:$0xff]
    %v29 = vld [vmem:[%s1 + $0x8] sm:$0xff]
    %v30 = vld [vmem:[%s1 + $0x10] sm:$0xff]
    %v31 = vld [vmem:[%s1 + $0x18] sm:$0xff]
    %v32 = vld [vmem:[%s1 + $0x20] sm:$0xff]
    %v33 = vld [vmem:[%s1 + $0x28] sm:$0xff]
    %v34 = vld [vmem:[%s1 + $0x30] sm:$0xff]
    %v35 = vld [vmem:[%s1 + $0x38] sm:$0xff]
    %vm36 = vcmask 261120
    %v38 = vsel %vm36, %v24, 0
    %v41 = vsel %vm36, %v25, 0
    %43 = vmatprep.subr.mxu0 0.0
    %44 = vmatpush1.msra.mxu0 0.0
    %45 = vmatprep.subr.mxu0 0.0
    %46 = vmatpush1.msra.mxu0 0.0
    %47 = vmatprep.subr.mxu0 0.0
    %48 = vmatpush1.msra.mxu0 0.0
    %49 = vmatprep.subr.mxu0 0.0
    %50 = vmatpush1.msra.mxu0 0.0
    %51 = vmatprep.subr.mxu0 0.0
    %52 = vmatpush1.msra.mxu0 0.0
    %53 = vmatprep.subr.mxu0 0.0
    %54 = vmatpush1.msra.mxu0 0.0
    %55 = vmatprep.subr.mxu0 0.0
    %56 = vmatpush1.msra.mxu0 0.0
    %57 = vmatprep.subr.mxu0 0.0
    %58 = vmatpush1.msra.mxu0 0.0
    %59 = vmatprep.subr.mxu0 0.0
    %60 = vmatpush1.msra.mxu0 0.0
    %61 = vmatprep.subr.mxu0 0.0
    %62 = vmatpush1.msra.mxu0 0.0
    %63 = vmatprep.subr.mxu0 0.0
    %64 = vmatpush1.msra.mxu0 0.0
    %65 = vmatprep.subr.mxu0 0.0
    %66 = vmatpush1.msra.mxu0 0.0
    %67 = vmatprep.subr.mxu0 0.0
    %68 = vmatpush1.msra.mxu0 %v31
    %69 = vmatprep.subr.mxu0 0.0
    %70 = vmatpush1.msra.mxu0 %v30
    %71 = vmatprep.subr.mxu0 0.0
    %72 = vmatpush1.msra.mxu0 %v29
    %73 = vmatprep.subr.mxu0 0.0
    %74 = vmatpush1.msra.mxu0 %v28
    %75 = vmatprep.subr.mxu0 0.0
    %76 = vmatpush2.msra.mxu0 0.0
    %77 = vmatprep.subr.mxu0 0.0
    %78 = vmatpush2.msra.mxu0 0.0
    %79 = vmatprep.subr.mxu0 0.0
    %80 = vmatpush2.msra.mxu0 0.0
    %81 = vmatprep.subr.mxu0 0.0
    %82 = vmatpush2.msra.mxu0 0.0
    %83 = vmatprep.subr.mxu0 0.0
    %84 = vmatpush2.msra.mxu0 0.0
    %85 = vmatprep.subr.mxu0 0.0
    %86 = vmatpush2.msra.mxu0 0.0
    %87 = vmatprep.subr.mxu0 0.0
    %88 = vmatpush2.msra.mxu0 0.0
    %89 = vmatprep.subr.mxu0 0.0
    %90 = vmatpush2.msra.mxu0 0.0
    %91 = vmatprep.subr.mxu0 0.0
    %92 = vmatpush2.msra.mxu0 0.0
    %93 = vmatprep.subr.mxu0 0.0
    %94 = vmatpush2.msra.mxu0 0.0
    %95 = vmatprep.subr.mxu0 0.0
    %96 = vmatpush2.msra.mxu0 0.0
    %97 = vmatprep.subr.mxu0 0.0
    %98 = vmatpush2.msra.mxu0 0.0
    %99 = vmatprep.subr.mxu0 0.0
    %100 = vmatpush2.msra.mxu0 0.0
    %101 = vmatprep.subr.mxu0 0.0
    %102 = vmatpush2.msra.mxu0 0.0
    %103 = vmatprep.subr.mxu0 0.0
    %104 = vmatpush2.msra.mxu0 0.0
    %105 = vmatprep.subr.mxu0 0.0
    %106 = vmatpush2.msra.mxu0 0.0
    %107 = vmatprep.mubr.f32.mxu0 0.0
    %108 = vmatmul.mubr.f32.gmra.mxu0 %v38
    %v109 = vpop.f32.mrf.mxu0
    %v110 = vadd.f32 0.0, %v109
    %v111 = vpop.f32.mrf.mxu0
    %112 = vmatprep.mubr.f32.mxu0 0.0
    %113 = vmatmul.mubr.f32.gmra.mxu0 %v41
    %v114 = vpop.f32.mrf.mxu0
    %v115 = vadd.f32 0.0, %v114
    %v116 = vpop.f32.mrf.mxu0
    %117 = vdwg.mxu0
    %v119 = vsel %vm36, %v26, 0
    %v122 = vsel %vm36, %v27, 0
    %124 = vmatprep.subr.mxu0 0.0
    %125 = vmatpush1.msra.mxu0 0.0
    %126 = vmatprep.subr.mxu0 0.0
    %127 = vmatpush1.msra.mxu0 0.0
    %128 = vmatprep.subr.mxu0 0.0
    %129 = vmatpush1.msra.mxu0 0.0
    %130 = vmatprep.subr.mxu0 0.0
    %131 = vmatpush1.msra.mxu0 0.0
    %132 = vmatprep.subr.mxu0 0.0
    %133 = vmatpush1.msra.mxu0 0.0
    %134 = vmatprep.subr.mxu0 0.0
    %135 = vmatpush1.msra.mxu0 0.0
    %136 = vmatprep.subr.mxu0 0.0
    %137 = vmatpush1.msra.mxu0 0.0
    %138 = vmatprep.subr.mxu0 0.0
    %139 = vmatpush1.msra.mxu0 0.0
    %140 = vmatprep.subr.mxu0 0.0
    %141 = vmatpush1.msra.mxu0 0.0
    %142 = vmatprep.subr.mxu0 0.0
    %143 = vmatpush1.msra.mxu0 0.0
    %144 = vmatprep.subr.mxu0 0.0
    %145 = vmatpush1.msra.mxu0 0.0
    %146 = vmatprep.subr.mxu0 0.0
    %147 = vmatpush1.msra.mxu0 0.0
    %148 = vmatprep.subr.mxu0 0.0
    %149 = vmatpush1.msra.mxu0 %v35
    %150 = vmatprep.subr.mxu0 0.0
    %151 = vmatpush1.msra.mxu0 %v34
    %152 = vmatprep.subr.mxu0 0.0
    %153 = vmatpush1.msra.mxu0 %v33
    %154 = vmatprep.subr.mxu0 0.0
    %155 = vmatpush1.msra.mxu0 %v32
    %156 = vmatprep.subr.mxu0 0.0
    %157 = vmatpush2.msra.mxu0 0.0
    %158 = vmatprep.subr.mxu0 0.0
    %159 = vmatpush2.msra.mxu0 0.0
    %160 = vmatprep.subr.mxu0 0.0
    %161 = vmatpush2.msra.mxu0 0.0
    %162 = vmatprep.subr.mxu0 0.0
    %163 = vmatpush2.msra.mxu0 0.0
    %164 = vmatprep.subr.mxu0 0.0
    %165 = vmatpush2.msra.mxu0 0.0
    %166 = vmatprep.subr.mxu0 0.0
    %167 = vmatpush2.msra.mxu0 0.0
    %168 = vmatprep.subr.mxu0 0.0
    %169 = vmatpush2.msra.mxu0 0.0
    %170 = vmatprep.subr.mxu0 0.0
    %171 = vmatpush2.msra.mxu0 0.0
    %172 = vmatprep.subr.mxu0 0.0
    %173 = vmatpush2.msra.mxu0 0.0
    %174 = vmatprep.subr.mxu0 0.0
    %175 = vmatpush2.msra.mxu0 0.0
    %176 = vmatprep.subr.mxu0 0.0
    %177 = vmatpush2.msra.mxu0 0.0
    %178 = vmatprep.subr.mxu0 0.0
    %179 = vmatpush2.msra.mxu0 0.0
    %180 = vmatprep.subr.mxu0 0.0
    %181 = vmatpush2.msra.mxu0 0.0
    %182 = vmatprep.subr.mxu0 0.0
    %183 = vmatpush2.msra.mxu0 0.0
    %184 = vmatprep.subr.mxu0 0.0
    %185 = vmatpush2.msra.mxu0 0.0
    %186 = vmatprep.subr.mxu0 0.0
    %187 = vmatpush2.msra.mxu0 0.0
    %188 = vmatprep.mubr.f32.mxu0 0.0
    %189 = vmatmul.mubr.f32.gmra.mxu0 %v119
    %v190 = vpop.f32.mrf.mxu0
    %v191 = vadd.f32 0.0, %v190
    %v192 = vpop.f32.mrf.mxu0
    %193 = vmatprep.mubr.f32.mxu0 0.0
    %194 = vmatmul.mubr.f32.gmra.mxu0 %v122
    %v195 = vpop.f32.mrf.mxu0
    %v196 = vadd.f32 0.0, %v195
    %v197 = vpop.f32.mrf.mxu0
    %198 = vdwg.mxu0
    %v199 = vadd.f32 %v20, %v110
    %v200 = vadd.f32 %v21, %v115
    %v201 = vadd.f32 %v22, %v191
    %v202 = vadd.f32 %v23, %v196
    %203 = vst [vmem:[#allocation2] sm:$0xff] %v199
    %204 = vst [vmem:[#allocation2 + $0x8] sm:$0xff] %v200
    %205 = vst [vmem:[#allocation2 + $0x10] sm:$0xff] %v201
    %206 = vst [vmem:[#allocation2 + $0x18] sm:$0xff] %v202
    // Predicated region
    $region14: #{batched_matmul.1} parent=1 // pred_check
      _
    $region15: #{batched_matmul.1} parent=1 // pred_check_branch
      %208 = sbr.rel (0) target = $region17
    $region16: #{batched_matmul.1} parent=1 // pred_region
      %s210 = ssub.s32 512, 512
      %211 = vsyncadd [#allocation3], %s210
      %s212 = sshll.u32 [#allocation2], 4
      %s213 = int_to_ptr.vmem [resolvable:$true] %s212
      %218 = dma.vmem_to_hbm [thread:$0]  %s213, 512, %s2, [#allocation3], 128, 128, 8
    $region17: #{batched_matmul.1} parent=1 // pred_fallthru
      _
    // Predicated region
    $region18: #{batched_matmul.1} parent=1 // pred_check
      _
    $region19: #{batched_matmul.1} parent=1 // pred_check_branch
      %220 = sbr.rel (0) target = $region21
    $region20: #{batched_matmul.1} parent=1 // pred_region
      %221 = dma.done [#allocation3], 512
    $region21: #{batched_matmul.1} parent=1 // pred_fallthru
      _
    %222 = vsyncpa [#allocation3], 1

</llo_original>
